<compile_context>
chip_gen: v7x
topology: tpu7x:2x2x1
jax: 0.10.0
libtpu: 0.0.40
codegen_flags: <defaults>
</compile_context>

<pallas_src>
import functools

import jax
import jax.numpy as jnp
from jax.experimental import pallas as pl
from jax.experimental.pallas import tpu as pltpu


def _round_up(x: int, m: int) -> int:
    return ((x + m - 1) // m) * m


def _is_pow2(n: int) -> bool:
    return n > 0 and (n & (n - 1)) == 0


def _aggregator_kernel(x_ref, w1bd_ref, b1_ref, w2b_ref, o_ref, *, num_agents):
    """One batch tile.

    x_ref  : [TB, A*nm]   lane-dense agent outputs (agent-major along lanes)
    w1bd   : [A*nm, A*H]  block-diagonal first gate layer (shared W1 per agent)
    b1     : [1, A*H]     first-layer bias tiled per agent
    w2b    : [A*H, A*nm]  second gate layer folded with the broadcast of each
                          agent's gate over its nm-lane group
    o_ref  : [TB, nm]
    """
    nm = o_ref.shape[-1]
    a = num_agents
    x = x_ref[...].astype(jnp.float32)            # [TB, A*nm]

    # ---- gate MLP (lane-dense matmuls; no in-kernel reshapes) ----
    h = jnp.dot(x, w1bd_ref[...], preferred_element_type=jnp.float32) + b1_ref[...]
    h = jnp.maximum(h, 0.0)                       # [TB, A*H]
    # Second layer + "broadcast gate over its nm-lane group" folded into one
    # matmul.  b2 is omitted: softmax over agents is shift-invariant.
    g = jnp.dot(h, w2b_ref[...], preferred_element_type=jnp.float32)   # [TB, A*nm]

    if _is_pow2(a):
        # ---- cyclic lane-group folds (XLU-cheap), results stay replicated ----
        def fold(v, op):
            r = v
            shift = nm
            while shift < a * nm:
                r = op(r, pltpu.roll(r, shift=shift, axis=1))
                shift *= 2
            return r

        m = fold(g, jnp.maximum)                  # per-agent max, lane-replicated
        e = jnp.exp(g - m)                        # [TB, A*nm]
        denom = fold(e, jnp.add)                  # true sum over agents, replicated
        inv = pl.reciprocal(denom, approx=True)   # EUP slot
        inv = inv * (2.0 - denom * inv)           # one Newton step keeps 5e-4 tol
        w = e * inv                               # per-agent softmax weight
        xw = x * w                                # [TB, A*nm]
        out_rep = fold(xw, jnp.add)               # every lane = sum over agents
        o_ref[...] = out_rep[:, :nm].astype(o_ref.dtype)
    else:
        # Fallback (non-power-of-2 agent count): full-lane reductions.
        m = jnp.max(g, axis=-1, keepdims=True)
        e = jnp.exp(g - m)
        denom = jnp.sum(e, axis=-1, keepdims=True)      # = nm * sum_a exp(g_a - m)
        inv = pl.reciprocal(denom, approx=True)
        inv = inv * (2.0 - denom * inv)
        w = e * (inv * float(nm))
        xw = x * w
        out = xw[:, 0:nm]
        for gi in range(1, a):
            out = out + xw[:, gi * nm:(gi + 1) * nm]
        o_ref[...] = out.astype(o_ref.dtype)


def aggregator_forward(agent_outputs, w1, b1, w2, b2=None, *,
                       max_block_rows=1024, num_cores=1, interpret=False):
    """agent_outputs: [B, A, nm] -> [B, nm].  w1:[nm,H], b1:[1,H], w2:[H,1], b2:[1,1].

    num_cores: set to 2 on v7x (2 TensorCores/chip) so each core gets several
    pipelined grid steps; leave at 1 on v5e/v6e.
    """
    B, A, nm = agent_outputs.shape
    if A == 1:                                    # module's num_agents == 1 fast path
        return agent_outputs[:, 0, :]
    H = w1.shape[1]

    # ---- wrapper-side layout work (free in XLA / constant-folded) ----
    x_flat = agent_outputs.reshape(B, A * nm)     # lane-dense input
    w1f = w1.astype(jnp.float32)
    b1f = b1.astype(jnp.float32).reshape(1, H)
    w2f = w2.astype(jnp.float32).reshape(H, 1)
    eye_a = jnp.eye(A, dtype=jnp.float32)
    w1bd = jnp.kron(eye_a, w1f)                               # [A*nm, A*H]
    b1rep = jnp.tile(b1f, (1, A))                             # [1, A*H]
    w2b = jnp.kron(eye_a, jnp.broadcast_to(w2f, (H, nm)))     # [A*H, A*nm]
    # b2 intentionally not passed: constant shift of every gate does not change softmax.

    # ---- tile size: HBM/step-overhead bound, so amortize with big tiles ----
    max_block_rows = max(8, _round_up(max_block_rows, 8))
    rows = _round_up(B, 8)
    if num_cores > 1:
        # Megacore chips: >= ~4 pipelined steps per core, tiles >= 128 rows.
        block_b = max(128, _round_up(pl.cdiv(B, 4 * num_cores), 8))
        block_b = min(block_b, max_block_rows, rows)
    else:
        # Single-TC chips: never split small/medium B (extra ~0.35us/step buys
        # nothing); large B streams in max_block_rows tiles (>=512 rows).
        block_b = min(rows, max_block_rows)
    grid_b = pl.cdiv(B, block_b)
    b_pad = grid_b * block_b
    if b_pad != B:                                # zero-padding is safe for this op
        x_flat = jnp.pad(x_flat, ((0, b_pad - B), (0, 0)))

    kernel = functools.partial(_aggregator_kernel, num_agents=A)
    out = pl.pallas_call(
        kernel,
        out_shape=jax.ShapeDtypeStruct((b_pad, nm), agent_outputs.dtype),
        grid_spec=pltpu.PrefetchScalarGridSpec(
            num_scalar_prefetch=0,
            grid=(grid_b,),
            in_specs=[
                pl.BlockSpec((block_b, A * nm), lambda i: (i, 0)),  # x (streamed)
                pl.BlockSpec((A * nm, A * H), lambda i: (0, 0)),    # W1 block-diag (resident)
                pl.BlockSpec((1, A * H), lambda i: (0, 0)),         # b1 (resident)
                pl.BlockSpec((A * H, A * nm), lambda i: (0, 0)),    # W2 folded (resident)
            ],
            out_specs=pl.BlockSpec((block_b, nm), lambda i: (i, 0)),
        ),
        compiler_params=pltpu.CompilerParams(
            dimension_semantics=("parallel",)),
        interpret=interpret,
    )(x_flat, w1bd, b1rep, w2b)
    return out[:B]


def aggregator_reference(x, w1, b1, w2, b2):
    """Pure-JAX reference of the PyTorch forward (b2 included)."""
    hp = jax.lax.Precision.HIGHEST
    h = jnp.maximum(jnp.einsum("ban,nh->bah", x, w1, precision=hp)
                    + b1.reshape(1, 1, -1), 0.0)
    g = jnp.einsum("bah,ho->bao", h, w2, precision=hp) + b2.reshape(1, 1, -1)
    w = jax.nn.softmax(g, axis=1)
    return jnp.sum(x * w, axis=1)


if __name__ == "__main__":
    # Small shapes consistent with the module: B=16, A=4 agents, nm=32 features,
    # gate-MLP hidden dim H=4 (the module's default).
    B, A, NM, H = 16, 4, 32, 4

    key = jax.random.PRNGKey(0)
    kx, k1, k2, k3, k4 = jax.random.split(key, 5)

    x = jax.random.normal(kx, (B, A, NM), dtype=jnp.float32)

    # Deterministic parameter init (same shapes as nn.Linear(nm,H), nn.Linear(H,1)).
    # PyTorch stores weights as [out, in]; we keep [in, out] for row-major dot.
    w1 = (jax.random.uniform(k1, (NM, H), dtype=jnp.float32) - 0.5) * (2.0 / jnp.sqrt(NM))
    b1 = (jax.random.uniform(k2, (1, H), dtype=jnp.float32) - 0.5) * (2.0 / jnp.sqrt(NM))
    w2 = (jax.random.uniform(k3, (H, 1), dtype=jnp.float32) - 0.5) * (2.0 / jnp.sqrt(H))
    b2 = (jax.random.uniform(k4, (1, 1), dtype=jnp.float32) - 0.5) * (2.0 / jnp.sqrt(H))

    out = aggregator_forward(x, w1, b1, w2, b2)
    out = jax.block_until_ready(out)

    ref = aggregator_reference(x, w1, b1, w2, b2)
    assert out.shape == (B, NM)
    assert jnp.allclose(out, ref, atol=5e-4, rtol=5e-4), "mismatch vs reference"

    print("KERNEL_OK")
</pallas_src>

<mosaic_0001>
module attributes {stable_mosaic.version = 11 : i64} {
  func.func @_aggregator_kernel(%arg0: i32, %arg1: memref<16x128xf32, #tpu.memory_space<vmem>>, %arg2: memref<128x16xf32, #tpu.memory_space<vmem>>, %arg3: memref<1x16xf32, #tpu.memory_space<vmem>>, %arg4: memref<16x128xf32, #tpu.memory_space<vmem>>, %arg5: memref<16x32xf32, #tpu.memory_space<vmem>>) attributes {dimension_semantics = [#tpu.dimension_semantics<parallel>], iteration_bounds = array<i64: 1>, scalar_prefetch = 0 : i64, scratch_operands = 0 : i64, tpu.core_type = #tpu.core_type<tc>, window_params = [{transform_indices = @transform_0, window_bounds = array<i64: 16, 128>}, {pipeline_mode = #tpu.pipeline_mode<synchronous>, transform_indices = @transform_1, window_bounds = array<i64: 128, 16>}, {pipeline_mode = #tpu.pipeline_mode<synchronous>, transform_indices = @transform_2, window_bounds = array<i64: 1, 16>}, {pipeline_mode = #tpu.pipeline_mode<synchronous>, transform_indices = @transform_3, window_bounds = array<i64: 16, 128>}, {transform_indices = @transform_4, window_bounds = array<i64: 16, 32>}]} {
    %c0 = arith.constant 0 : index
    %c0_0 = arith.constant 0 : index
    %0 = vector.load %arg1[%c0, %c0_0] : memref<16x128xf32, #tpu.memory_space<vmem>>, vector<16x128xf32>
    %c0_1 = arith.constant 0 : index
    %c0_2 = arith.constant 0 : index
    %1 = vector.load %arg2[%c0_1, %c0_2] : memref<128x16xf32, #tpu.memory_space<vmem>>, vector<128x16xf32>
    %cst = arith.constant dense<0.000000e+00> : vector<16x16xf32>
    %2 = tpu.matmul %0, %1, %cst {dimension_numbers = #tpu.dot_dimension_numbers<[1], [0], [0], [1], [0, 0, 1, 1], [], []>} : vector<16x128xf32>, vector<128x16xf32>, vector<16x16xf32> -> vector<16x16xf32>
    %c0_3 = arith.constant 0 : index
    %c0_4 = arith.constant 0 : index
    %3 = vector.load %arg3[%c0_3, %c0_4] : memref<1x16xf32, #tpu.memory_space<vmem>>, vector<1x16xf32>
    %4 = vector.broadcast %3 : vector<1x16xf32> to vector<16x16xf32>
    %5 = arith.addf %2, %4 : vector<16x16xf32>
    %cst_5 = arith.constant 0.000000e+00 : f32
    %6 = vector.broadcast %cst_5 : f32 to vector<16x16xf32>
    %7 = arith.maximumf %5, %6 : vector<16x16xf32>
    %c0_6 = arith.constant 0 : index
    %c0_7 = arith.constant 0 : index
    %8 = vector.load %arg4[%c0_6, %c0_7] : memref<16x128xf32, #tpu.memory_space<vmem>>, vector<16x128xf32>
    %cst_8 = arith.constant dense<0.000000e+00> : vector<16x128xf32>
    %9 = tpu.matmul %7, %8, %cst_8 {dimension_numbers = #tpu.dot_dimension_numbers<[1], [0], [0], [1], [0, 0, 1, 1], [], []>} : vector<16x16xf32>, vector<16x128xf32>, vector<16x128xf32> -> vector<16x128xf32>
    %c32_i32 = arith.constant 32 : i32
    %10 = tpu.dynamic_rotate %9 by %c32_i32 dim 1 : vector<16x128xf32>, i32 -> vector<16x128xf32>
    %11 = arith.maximumf %9, %10 : vector<16x128xf32>
    %c64_i32 = arith.constant 64 : i32
    %12 = tpu.dynamic_rotate %11 by %c64_i32 dim 1 : vector<16x128xf32>, i32 -> vector<16x128xf32>
    %13 = arith.maximumf %11, %12 : vector<16x128xf32>
    %14 = arith.subf %9, %13 : vector<16x128xf32>
    %15 = math.exp %14 : vector<16x128xf32>
    %c32_i32_9 = arith.constant 32 : i32
    %16 = tpu.dynamic_rotate %15 by %c32_i32_9 dim 1 : vector<16x128xf32>, i32 -> vector<16x128xf32>
    %17 = arith.addf %15, %16 : vector<16x128xf32>
    %c64_i32_10 = arith.constant 64 : i32
    %18 = tpu.dynamic_rotate %17 by %c64_i32_10 dim 1 : vector<16x128xf32>, i32 -> vector<16x128xf32>
    %19 = arith.addf %17, %18 : vector<16x128xf32>
    %20 = tpu.reciprocal %19 {approx = true} : vector<16x128xf32> -> vector<16x128xf32>
    %21 = arith.mulf %19, %20 : vector<16x128xf32>
    %cst_11 = arith.constant 2.000000e+00 : f32
    %22 = vector.broadcast %cst_11 : f32 to vector<16x128xf32>
    %23 = arith.subf %22, %21 : vector<16x128xf32>
    %24 = arith.mulf %20, %23 : vector<16x128xf32>
    %25 = arith.mulf %15, %24 : vector<16x128xf32>
    %26 = arith.mulf %0, %25 : vector<16x128xf32>
    %c32_i32_12 = arith.constant 32 : i32
    %27 = tpu.dynamic_rotate %26 by %c32_i32_12 dim 1 : vector<16x128xf32>, i32 -> vector<16x128xf32>
    %28 = arith.addf %26, %27 : vector<16x128xf32>
    %c64_i32_13 = arith.constant 64 : i32
    %29 = tpu.dynamic_rotate %28 by %c64_i32_13 dim 1 : vector<16x128xf32>, i32 -> vector<16x128xf32>
    %30 = arith.addf %28, %29 : vector<16x128xf32>
    %31 = vector.extract_strided_slice %30 {offsets = [0, 0], sizes = [16, 32], strides = [1, 1]} : vector<16x128xf32> to vector<16x32xf32>
    %c0_14 = arith.constant 0 : index
    %c0_15 = arith.constant 0 : index
    %32 = vector.load %arg5[%c0_14, %c0_15] : memref<16x32xf32, #tpu.memory_space<vmem>>, vector<16x32xf32>
    tpu.vector_store %arg5[%c0_14, %c0_15], %31 {strides = array<i32>} : memref<16x32xf32, #tpu.memory_space<vmem>>, vector<16x32xf32>,
    return
  }
  func.func @transform_0(%arg0: i32) -> (i32, i32) {
    %c0_i32 = arith.constant 0 : i32
    %c0_i32_0 = arith.constant 0 : i32
    return %arg0, %c0_i32 : i32, i32
  }
  func.func @transform_1(%arg0: i32) -> (i32, i32) {
    %c0_i32 = arith.constant 0 : i32
    %c0_i32_0 = arith.constant 0 : i32
    %c0_i32_1 = arith.constant 0 : i32
    return %c0_i32, %c0_i32_0 : i32, i32
  }
  func.func @transform_2(%arg0: i32) -> (i32, i32) {
    %c0_i32 = arith.constant 0 : i32
    %c0_i32_0 = arith.constant 0 : i32
    %c0_i32_1 = arith.constant 0 : i32
    return %c0_i32, %c0_i32_0 : i32, i32
  }
  func.func @transform_3(%arg0: i32) -> (i32, i32) {
    %c0_i32 = arith.constant 0 : i32
    %c0_i32_0 = arith.constant 0 : i32
    %c0_i32_1 = arith.constant 0 : i32
    return %c0_i32, %c0_i32_0 : i32, i32
  }
  func.func @transform_4(%arg0: i32) -> (i32, i32) {
    %c0_i32 = arith.constant 0 : i32
    %c0_i32_0 = arith.constant 0 : i32
    return %arg0, %c0_i32 : i32, i32
  }
}

</mosaic_0001>

<llo_original>
// kernel: tpu_custom_call.1
$region0: #{tpu_custom_call.1}
  #allocation0 [shape = 'u32[]', space=smem, size = 0x4, offset = 0x4, fixed_abs, tag = 'smem constant byte address 0x4 - core index']
  #allocation1 [shape = 'u32[144,128]{1,0:T(1,128)}', space=vmem, size = 0x12000, scoped, tag = 'internal scratch']
  %s0 = inlined_call_operand.vmem [shape: f32[16,128], index: 0, kind: input, shape index: {}]
  %s1 = inlined_call_operand.vmem [shape: f32[128,16], index: 1, kind: input, shape index: {}]
  %s2 = inlined_call_operand.vmem [shape: f32[1,16], index: 2, kind: input, shape index: {}]
  %s3 = inlined_call_operand.vmem [shape: f32[16,128], index: 3, kind: input, shape index: {}]
  %s4 = inlined_call_operand.hbm [shape: f32[16,32], index: 4, kind: output, shape index: {}]
  %s5 = sld [smem:[#allocation0]]
  $region26: #{tpu_custom_call.1} parent=0
    _
  %s7 = ssub.s32 1, %s5
  %s8 = scalar_select 0, %s7, %s5
  $region1: #{tpu_custom_call.1} parent=0
    #allocation2 [shape = 'u8[8192]{0}', space=vmem, size = 0x2000, scoped, tag = 'output window, operand 0, single buffered']
    #allocation3 [shape = 's32[1]{0}', space=sflag, size = 0x4, scoped, tag = 'scoped memory for tpu_custom_call.1']
    %9 = vsyncpa [#allocation3], 0
    // Predicated region
    $region2: #{tpu_custom_call.1} parent=1 // pred_check
      _
    $region3: #{tpu_custom_call.1} parent=1 // pred_check_branch
      %11 = sbr.rel (0) target = $region5
    $region4: #{tpu_custom_call.1} parent=1 // pred_region
      _
    $region5: #{tpu_custom_call.1} parent=1 // pred_fallthru
      _
    // Predicated region
    $region6: #{tpu_custom_call.1} parent=1 // pred_check
      _
    $region7: #{tpu_custom_call.1} parent=1 // pred_check_branch
      %13 = sbr.rel (0) target = $region9
    $region8: #{tpu_custom_call.1} parent=1 // pred_region
      _
    $region9: #{tpu_custom_call.1} parent=1 // pred_fallthru
      _
    // Predicated region
    $region10: #{tpu_custom_call.1} parent=1 // pred_check
      _
    $region11: #{tpu_custom_call.1} parent=1 // pred_check_branch
      %15 = sbr.rel (0) target = $region13
    $region12: #{tpu_custom_call.1} parent=1 // pred_region
      _
    $region13: #{tpu_custom_call.1} parent=1 // pred_fallthru
      _
    // Predicated region
    $region14: #{tpu_custom_call.1} parent=1 // pred_check
      _
    $region15: #{tpu_custom_call.1} parent=1 // pred_check_branch
      %17 = sbr.rel (0) target = $region17
    $region16: #{tpu_custom_call.1} parent=1 // pred_region
      _
    $region17: #{tpu_custom_call.1} parent=1 // pred_fallthru
      _
    %v18 = vld [vmem:[%s0] sm:$0xff]
    %v19 = vld [vmem:[%s0 + $0x8] sm:$0xff]
    %v20 = vld [vmem:[%s1] sm:$0xff]
    %v21 = vld [vmem:[%s1 + $0x8] sm:$0xff]
    %v22 = vld [vmem:[%s1 + $0x10] sm:$0xff]
    %v23 = vld [vmem:[%s1 + $0x18] sm:$0xff]
    %v24 = vld [vmem:[%s1 + $0x20] sm:$0xff]
    %v25 = vld [vmem:[%s1 + $0x28] sm:$0xff]
    %v26 = vld [vmem:[%s1 + $0x30] sm:$0xff]
    %v27 = vld [vmem:[%s1 + $0x38] sm:$0xff]
    %v28 = vld [vmem:[%s1 + $0x40] sm:$0xff]
    %v29 = vld [vmem:[%s1 + $0x48] sm:$0xff]
    %v30 = vld [vmem:[%s1 + $0x50] sm:$0xff]
    %v31 = vld [vmem:[%s1 + $0x58] sm:$0xff]
    %v32 = vld [vmem:[%s1 + $0x60] sm:$0xff]
    %v33 = vld [vmem:[%s1 + $0x68] sm:$0xff]
    %v34 = vld [vmem:[%s1 + $0x70] sm:$0xff]
    %v35 = vld [vmem:[%s1 + $0x78] sm:$0xff]
    %v36 = vld [vmem:[%s2] sm:$0x1]
    %v38 = vlaneseq
    %v39 = vshrl.u32 %v38, 7
    %v40 = vsub.s32 0, %v39
    %v41 = vrot.slane %v36, %v40
    %43 = vmatprep.subr.mxu0 0.0
    %44 = vmatpush1.msra.mxu0 %v20
    %45 = vmatprep.subr.mxu0 0.0
    %46 = vmatpush1.msra.mxu0 %v21
    %47 = vmatprep.subr.mxu0 0.0
    %48 = vmatpush1.msra.mxu0 %v22
    %49 = vmatprep.subr.mxu0 0.0
    %50 = vmatpush1.msra.mxu0 %v23
    %51 = vmatprep.subr.mxu0 0.0
    %52 = vmatpush1.msra.mxu0 %v24
    %53 = vmatprep.subr.mxu0 0.0
    %54 = vmatpush1.msra.mxu0 %v25
    %55 = vmatprep.subr.mxu0 0.0
    %56 = vmatpush1.msra.mxu0 %v26
    %57 = vmatprep.subr.mxu0 0.0
    %58 = vmatpush1.msra.mxu0 %v27
    %59 = vmatprep.subr.mxu0 0.0
    %60 = vmatpush1.msra.mxu0 %v28
    %61 = vmatprep.subr.mxu0 0.0
    %62 = vmatpush1.msra.mxu0 %v29
    %63 = vmatprep.subr.mxu0 0.0
    %64 = vmatpush1.msra.mxu0 %v30
    %65 = vmatprep.subr.mxu0 0.0
    %66 = vmatpush1.msra.mxu0 %v31
    %67 = vmatprep.subr.mxu0 0.0
    %68 = vmatpush1.msra.mxu0 %v32
    %69 = vmatprep.subr.mxu0 0.0
    %70 = vmatpush1.msra.mxu0 %v33
    %71 = vmatprep.subr.mxu0 0.0
    %72 = vmatpush1.msra.mxu0 %v34
    %73 = vmatprep.subr.mxu0 0.0
    %74 = vmatpush1.msra.mxu0 %v35
    %75 = vmatprep.subr.mxu0 0.0
    %76 = vmatpush1.msra.mxu0 0.0
    %77 = vmatprep.subr.mxu0 0.0
    %78 = vmatpush1.msra.mxu0 0.0
    %79 = vmatprep.subr.mxu0 0.0
    %80 = vmatpush1.msra.mxu0 0.0
    %81 = vmatprep.subr.mxu0 0.0
    %82 = vmatpush1.msra.mxu0 0.0
    %83 = vmatprep.subr.mxu0 0.0
    %84 = vmatpush1.msra.mxu0 0.0
    %85 = vmatprep.subr.mxu0 0.0
    %86 = vmatpush1.msra.mxu0 0.0
    %87 = vmatprep.subr.mxu0 0.0
    %88 = vmatpush1.msra.mxu0 0.0
    %89 = vmatprep.subr.mxu0 0.0
    %90 = vmatpush1.msra.mxu0 0.0
    %91 = vmatprep.subr.mxu0 0.0
    %92 = vmatpush1.msra.mxu0 0.0
    %93 = vmatprep.subr.mxu0 0.0
    %94 = vmatpush1.msra.mxu0 0.0
    %95 = vmatprep.subr.mxu0 0.0
    %96 = vmatpush1.msra.mxu0 0.0
    %97 = vmatprep.subr.mxu0 0.0
    %98 = vmatpush1.msra.mxu0 0.0
    %99 = vmatprep.subr.mxu0 0.0
    %100 = vmatpush1.msra.mxu0 0.0
    %101 = vmatprep.subr.mxu0 0.0
    %102 = vmatpush1.msra.mxu0 0.0
    %103 = vmatprep.subr.mxu0 0.0
    %104 = vmatpush1.msra.mxu0 0.0
    %105 = vmatprep.subr.mxu0 0.0
    %106 = vmatpush1.msra.mxu0 0.0
    %107 = vmatprep.mubr.f32.mxu0 0.0
    %108 = vmatmul.mubr.f32.gmra.mrb[0].mxu0 %v18
    %v109 = vpop.f32.mrb[0].mxu0
    %v110 = vadd.f32 %v41, %v109
    %v111 = vpop.f32.mrb[0].mxu0
    %112 = vmatprep.mubr.f32.mxu0 0.0
    %113 = vmatmul.mubr.f32.gmra.mrb[0].mxu0 %v19
    %v114 = vpop.f32.mrb[0].mxu0
    %v115 = vadd.f32 %v41, %v114
    %v116 = vpop.f32.mrb[0].mxu0
    %117 = vdwg.mxu0
    %v118 = vmax.f32 %v110, 0.0
    %v119 = vmax.f32 %v115, 0.0
    %v120 = vld [vmem:[%s3] sm:$0xff]
    %v121 = vld [vmem:[%s3 + $0x8] sm:$0xff]
    %vm122 = vcmask 130048
    %v124 = vsel %vm122, %v118, 0
    %v127 = vsel %vm122, %v119, 0
    %129 = vmatprep.subr.mxu0 0.0
    %130 = vmatpush1.msra.mxu0 %v120
    %131 = vmatprep.subr.mxu0 0.0
    %132 = vmatpush1.msra.mxu0 %v121
    %133 = vmatprep.subr.mxu0 0.0
    %134 = vmatpush1.msra.mxu0 0.0
    %135 = vmatprep.subr.mxu0 0.0
    %136 = vmatpush1.msra.mxu0 0.0
    %137 = vmatprep.subr.mxu0 0.0
    %138 = vmatpush1.msra.mxu0 0.0
    %139 = vmatprep.subr.mxu0 0.0
    %140 = vmatpush1.msra.mxu0 0.0
    %141 = vmatprep.subr.mxu0 0.0
    %142 = vmatpush1.msra.mxu0 0.0
    %143 = vmatprep.subr.mxu0 0.0
    %144 = vmatpush1.msra.mxu0 0.0
    %145 = vmatprep.subr.mxu0 0.0
    %146 = vmatpush1.msra.mxu0 0.0
    %147 = vmatprep.subr.mxu0 0.0
    %148 = vmatpush1.msra.mxu0 0.0
    %149 = vmatprep.subr.mxu0 0.0
    %150 = vmatpush1.msra.mxu0 0.0
    %151 = vmatprep.subr.mxu0 0.0
    %152 = vmatpush1.msra.mxu0 0.0
    %153 = vmatprep.subr.mxu0 0.0
    %154 = vmatpush1.msra.mxu0 0.0
    %155 = vmatprep.subr.mxu0 0.0
    %156 = vmatpush1.msra.mxu0 0.0
    %157 = vmatprep.subr.mxu0 0.0
    %158 = vmatpush1.msra.mxu0 0.0
    %159 = vmatprep.subr.mxu0 0.0
    %160 = vmatpush1.msra.mxu0 0.0
    %161 = vmatprep.subr.mxu0 0.0
    %162 = vmatpush1.msra.mxu0 0.0
    %163 = vmatprep.subr.mxu0 0.0
    %164 = vmatpush1.msra.mxu0 0.0
    %165 = vmatprep.subr.mxu0 0.0
    %166 = vmatpush1.msra.mxu0 0.0
    %167 = vmatprep.subr.mxu0 0.0
    %168 = vmatpush1.msra.mxu0 0.0
    %169 = vmatprep.subr.mxu0 0.0
    %170 = vmatpush1.msra.mxu0 0.0
    %171 = vmatprep.subr.mxu0 0.0
    %172 = vmatpush1.msra.mxu0 0.0
    %173 = vmatprep.subr.mxu0 0.0
    %174 = vmatpush1.msra.mxu0 0.0
    %175 = vmatprep.subr.mxu0 0.0
    %176 = vmatpush1.msra.mxu0 0.0
    %177 = vmatprep.subr.mxu0 0.0
    %178 = vmatpush1.msra.mxu0 0.0
    %179 = vmatprep.subr.mxu0 0.0
    %180 = vmatpush1.msra.mxu0 0.0
    %181 = vmatprep.subr.mxu0 0.0
    %182 = vmatpush1.msra.mxu0 0.0
    %183 = vmatprep.subr.mxu0 0.0
    %184 = vmatpush1.msra.mxu0 0.0
    %185 = vmatprep.subr.mxu0 0.0
    %186 = vmatpush1.msra.mxu0 0.0
    %187 = vmatprep.subr.mxu0 0.0
    %188 = vmatpush1.msra.mxu0 0.0
    %189 = vmatprep.subr.mxu0 0.0
    %190 = vmatpush1.msra.mxu0 0.0
    %191 = vmatprep.subr.mxu0 0.0
    %192 = vmatpush1.msra.mxu0 0.0
    %193 = vmatprep.mubr.f32.mxu0 0.0
    %194 = vmatmul.mubr.f32.gmra.mrb[0].mxu0 %v124
    %v195 = vpop.f32.mrb[0].mxu0
    %v196 = vadd.f32 0.0, %v195
    %v197 = vpop.f32.mrb[0].mxu0
    %198 = vmatprep.mubr.f32.mxu0 0.0
    %199 = vmatmul.mubr.f32.gmra.mrb[0].mxu0 %v127
    %v200 = vpop.f32.mrb[0].mxu0
    %v201 = vadd.f32 0.0, %v200
    %v202 = vpop.f32.mrb[0].mxu0
    %203 = vdwg.mxu0
    %204 = vrot.lane.b32.xlu0 %v196, 32
    %v205 = vpop.permute.xlu0 %204
    %206 = vrot.lane.b32.xlu0 %v201, 32
    %v207 = vpop.permute.xlu0 %206
    %v208 = vmax.f32 %v196, %v205
    %v209 = vmax.f32 %v201, %v207
    %210 = vrot.lane.b32.xlu0 %v208, 64
    %v211 = vpop.permute.xlu0 %210
    %212 = vrot.lane.b32.xlu0 %v209, 64
    %v213 = vpop.permute.xlu0 %212
    %v214 = vmax.f32 %v208, %v211
    %v215 = vmax.f32 %v209, %v213
    %v216 = vsub.f32 %v196, %v214
    %v217 = vsub.f32 %v201, %v215
    %v218 = vmul.f32 %v216, 1.442695
    %v219 = vpow.pop %v218
    %v220 = vmul.f32 %v217, 1.442695
    %v221 = vpow.pop %v220
    %222 = vrot.lane.b32.xlu0 %v219, 32
    %v223 = vpop.permute.xlu0 %222
    %224 = vrot.lane.b32.xlu0 %v221, 32
    %v225 = vpop.permute.xlu0 %224
    %v226 = vadd.f32 %v219, %v223
    %v227 = vadd.f32 %v221, %v225
    %228 = vrot.lane.b32.xlu0 %v226, 64
    %v229 = vpop.permute.xlu0 %228
    %230 = vrot.lane.b32.xlu0 %v227, 64
    %v231 = vpop.permute.xlu0 %230
    %v232 = vadd.f32 %v226, %v229
    %v233 = vadd.f32 %v227, %v231
    %v234 = vrcp.pop %v232
    %v235 = vrcp.pop %v233
    %v236 = vmul.f32 %v232, %v234
    %v237 = vmul.f32 %v233, %v235
    %v238 = vsub.f32 2.0, %v236
    %v239 = vsub.f32 2.0, %v237
    %v240 = vmul.f32 %v234, %v238
    %v241 = vmul.f32 %v235, %v239
    %v242 = vmul.f32 %v219, %v240
    %v243 = vmul.f32 %v221, %v241
    %v244 = vmul.f32 %v18, %v242
    %v245 = vmul.f32 %v19, %v243
    %246 = vrot.lane.b32.xlu0 %v244, 32
    %v247 = vpop.permute.xlu0 %246
    %248 = vrot.lane.b32.xlu0 %v245, 32
    %v249 = vpop.permute.xlu0 %248
    %v250 = vadd.f32 %v244, %v247
    %v251 = vadd.f32 %v245, %v249
    %252 = vrot.lane.b32.xlu0 %v250, 64
    %v253 = vpop.permute.xlu0 %252
    %254 = vrot.lane.b32.xlu0 %v251, 64
    %v255 = vpop.permute.xlu0 %254
    %v256 = vadd.f32 %v250, %v253
    %v257 = vadd.f32 %v251, %v255
    %vm258 = vcmask 261120
    %259 = vst.msk [vmem:[#allocation2] sm:$0xff] %vm258, %v256
    %260 = vst.msk [vmem:[#allocation2 + $0x8] sm:$0xff] %vm258, %v257
    // Predicated region
    $region18: #{tpu_custom_call.1} parent=1 // pred_check
      _
    $region19: #{tpu_custom_call.1} parent=1 // pred_check_branch
      %262 = sbr.rel (0) target = $region21
    $region20: #{tpu_custom_call.1} parent=1 // pred_region
      %s264 = ssub.s32 256, 256
      %265 = vsyncadd [#allocation3], %s264
      %s266 = sshll.u32 [#allocation2], 4
      %s267 = int_to_ptr.vmem [resolvable:$true] %s266
      %272 = dma.vmem_to_hbm [thread:$0]  %s267, 256, %s4, [#allocation3], 128, 128, 8
    $region21: #{tpu_custom_call.1} parent=1 // pred_fallthru
      _
    // Predicated region
    $region22: #{tpu_custom_call.1} parent=1 // pred_check
      _
    $region23: #{tpu_custom_call.1} parent=1 // pred_check_branch
      %274 = sbr.rel (0) target = $region25
    $region24: #{tpu_custom_call.1} parent=1 // pred_region
      %275 = dma.done [#allocation3], 256
    $region25: #{tpu_custom_call.1} parent=1 // pred_fallthru
      _
    %276 = vsyncpa [#allocation3], 1

</llo_original>
